<compile_context>
chip_gen: v7x
topology: tpu7x:2x2x1
jax: 0.10.0
libtpu: 0.0.40
codegen_flags: <defaults>
</compile_context>

<pallas_src>
import functools
import math

import numpy as np
import jax
import jax.numpy as jnp
from jax.experimental import pallas as pl
from jax.experimental.pallas import tpu as pltpu


def _round_up(x, m):
    return ((x + m - 1) // m) * m


# ---------------------------------------------------------------------------
# Fused multi-layer projection kernel (one batch tile per grid step).
#   x_ref : (tm, in_pad)            compute dtype (bf16 or f32)
#   w_ref : (L, k_max, out_pad)     compute dtype, zero padded
#   b_ref : (L, 1, out_pad)         float32, zero padded
#   o_ref : (tm, out_pad)           output dtype
# ---------------------------------------------------------------------------
def _projection_kernel(x_ref, w_ref, b_ref, o_ref, *, n_layers, in_pad,
                       out_pad, apply_act, negative_slope, compute_dtype):
    k_max = w_ref.shape[1]
    act = x_ref[...].astype(compute_dtype)          # (tm, in_pad)
    for l in range(n_layers):                       # static unrolled layer loop
        k_l = in_pad if l == 0 else out_pad
        w_l = w_ref[l] if k_l == k_max else w_ref[l, :k_l, :]
        # MXU matmul, f32 accumulation.
        y = jnp.dot(act, w_l, preferred_element_type=jnp.float32)
        y = y + b_ref[l]                            # f32 epilogue (bias add)
        if l < n_layers - 1:
            if apply_act:                           # LeakyReLU(0.2), f32 VPU
                y = jnp.where(y >= 0, y, negative_slope * y)
            act = y.astype(compute_dtype)           # stays resident on-chip
        else:
            o_ref[...] = y.astype(o_ref.dtype)      # lane-dense store


# ---------------------------------------------------------------------------
# Wrapper: padding / stacking / tiling and the pallas_call.
# ---------------------------------------------------------------------------
def projection_forward(x, params, layer_type=0, *,
                       compute_dtype=jnp.bfloat16, negative_slope=0.2,
                       max_tm=256):
    """y = Projection(x) with params = [(W[in,out], b[out]), ...]."""
    n_layers = len(params)
    M, K0 = x.shape
    N = params[0][0].shape[1]
    for l, (w, b) in enumerate(params):
        k_l = K0 if l == 0 else N
        assert w.shape == (k_l, N), (l, w.shape)
        assert b.shape == (N,), (l, b.shape)

    # Lane-dense feature padding (multiples of 128).
    in_pad = _round_up(K0, 128)
    out_pad = _round_up(N, 128)
    k_max = max(in_pad, out_pad)

    # Batch tiling: full (8-padded) batch if small, otherwise max_tm tiles.
    m8 = _round_up(M, 8)
    if m8 <= max_tm:
        tm, m_pad = m8, m8
    else:
        tm = max_tm
        m_pad = _round_up(M, tm)

    # Zero-pad + cast inputs. Padded weight rows/cols and bias entries are 0,
    # so padded lanes carry exact zeros through every layer.
    x_p = jnp.pad(x, ((0, m_pad - M), (0, in_pad - K0))).astype(compute_dtype)
    w_stack = jnp.stack([
        jnp.pad(w, ((0, k_max - w.shape[0]), (0, out_pad - N)))
        for (w, _) in params]).astype(compute_dtype)
    b_stack = jnp.stack([
        jnp.pad(b, (0, out_pad - N)).reshape(1, out_pad)
        for (_, b) in params]).astype(jnp.float32)

    apply_act = (layer_type > 1) and (n_layers > 1)

    # VMEM budget (double-buffered x/out blocks, resident weight/bias stack).
    cbytes = np.dtype(compute_dtype).itemsize
    obytes = np.dtype(x.dtype).itemsize
    vmem_need = (2 * tm * in_pad * cbytes                       # x blocks
                 + 2 * n_layers * k_max * out_pad * cbytes      # weight stack
                 + 2 * n_layers * 8 * out_pad * 4               # bias tiles
                 + 2 * tm * out_pad * obytes                    # out blocks
                 + (1 << 20))                                   # slack
    assert vmem_need <= (60 << 20), (
        "fused projection exceeds VMEM budget; reduce tile or split layers")
    vmem_limit = int(min(max(2 * vmem_need, 32 << 20), 64 << 20))

    # Advisory cost estimate for the XLA scheduler.
    flops = 0
    k_prev = in_pad
    for _ in range(n_layers):
        flops += 2 * m_pad * k_prev * out_pad
        k_prev = out_pad
    bytes_accessed = int(x_p.size * cbytes + w_stack.size * cbytes
                         + b_stack.size * 4 + m_pad * out_pad * obytes)

    kernel = functools.partial(
        _projection_kernel, n_layers=n_layers, in_pad=in_pad, out_pad=out_pad,
        apply_act=apply_act, negative_slope=negative_slope,
        compute_dtype=compute_dtype)

    y_pad = pl.pallas_call(
        kernel,
        out_shape=jax.ShapeDtypeStruct((m_pad, out_pad), x.dtype),
        grid_spec=pltpu.PrefetchScalarGridSpec(
            num_scalar_prefetch=0,
            grid=(m_pad // tm,),
            in_specs=[
                pl.BlockSpec((tm, in_pad), lambda i: (i, 0)),
                pl.BlockSpec((n_layers, k_max, out_pad), lambda i: (0, 0, 0)),
                pl.BlockSpec((n_layers, 1, out_pad), lambda i: (0, 0, 0)),
            ],
            out_specs=pl.BlockSpec((tm, out_pad), lambda i: (i, 0)),
        ),
        compiler_params=pltpu.CompilerParams(
            dimension_semantics=("parallel",),
            vmem_limit_bytes=vmem_limit),
        cost_estimate=pl.CostEstimate(
            flops=int(flops), transcendentals=0,
            bytes_accessed=bytes_accessed),
    )(x_p, w_stack, b_stack)

    return y_pad[:M, :N]


# ---------------------------------------------------------------------------
# Parameter init (mirrors PyTorch: xavier_normal_ weights, default bias init).
# Weights stored as [in, out] (transpose of nn.Linear) so forward is x @ W + b.
# ---------------------------------------------------------------------------
def init_projection_params(key, in_planes, out_planes=None, n_layers=1):
    if out_planes is None:
        out_planes = in_planes
    params = []
    _out = None
    for i in range(n_layers):
        _in = in_planes if i == 0 else _out
        _out = out_planes
        key, kw, kb = jax.random.split(key, 3)
        std = math.sqrt(2.0 / (_in + _out))          # xavier_normal_
        w = std * jax.random.normal(kw, (_in, _out), dtype=jnp.float32)
        bound = 1.0 / math.sqrt(_in)                 # nn.Linear bias default
        b = jax.random.uniform(kb, (_out,), dtype=jnp.float32,
                               minval=-bound, maxval=bound)
        params.append((w, b))
    return params


def projection_reference(x, params, layer_type=0):
    n_layers = len(params)
    y = x
    for i, (w, b) in enumerate(params):
        y = y @ w + b
        if (i < n_layers - 1) and (layer_type > 1):
            y = jnp.where(y >= 0, y, 0.2 * y)
    return y


if __name__ == "__main__":
    key = jax.random.PRNGKey(0)

    # Config matching the module defaults-ish: 2 layers with LeakyReLU between.
    batch, in_planes, out_planes = 8, 32, 32
    n_layers, layer_type = 2, 2

    key, kx, kp = jax.random.split(key, 3)
    x = jax.random.normal(kx, (batch, in_planes), dtype=jnp.float32)
    params = init_projection_params(kp, in_planes, out_planes, n_layers)
    y_ref = projection_reference(x, params, layer_type=layer_type)

    # f32 compute path: exact match to reference.
    y32 = jax.block_until_ready(
        projection_forward(x, params, layer_type=layer_type,
                           compute_dtype=jnp.float32))
    assert y32.shape == (batch, out_planes)
    assert jnp.allclose(y32, y_ref, atol=1e-5, rtol=1e-5), "f32 mismatch"

    # bf16-input / f32-accumulate path (default, MXU-friendly): loose tol.
    ybf = jax.block_until_ready(
        projection_forward(x, params, layer_type=layer_type))
    assert ybf.shape == (batch, out_planes)
    assert jnp.allclose(ybf, y_ref, atol=3e-2, rtol=3e-2), "bf16 mismatch"

    # Asymmetric in/out (exercises the per-layer K slice of the weight stack).
    key, kx2, kp2 = jax.random.split(key, 3)
    x2 = jax.random.normal(kx2, (5, 160), dtype=jnp.float32)
    params2 = init_projection_params(kp2, 160, 32, 2)
    y2 = jax.block_until_ready(
        projection_forward(x2, params2, layer_type=2,
                           compute_dtype=jnp.float32))
    y2_ref = projection_reference(x2, params2, layer_type=2)
    assert jnp.allclose(y2, y2_ref, atol=1e-4, rtol=1e-4), "asym mismatch"

    # Single layer, no activation.
    key, kx3, kp3 = jax.random.split(key, 3)
    x3 = jax.random.normal(kx3, (7, 48), dtype=jnp.float32)
    params3 = init_projection_params(kp3, 48, 64, 1)
    y3 = jax.block_until_ready(
        projection_forward(x3, params3, layer_type=0,
                           compute_dtype=jnp.float32))
    y3_ref = projection_reference(x3, params3, layer_type=0)
    assert jnp.allclose(y3, y3_ref, atol=1e-5, rtol=1e-5), "1-layer mismatch"

    print("KERNEL_OK")
</pallas_src>

<mosaic_0001>
module attributes {stable_mosaic.version = 11 : i64} {
  func.func @_projection_kernel(%arg0: i32, %arg1: memref<8x128xf32, #tpu.memory_space<vmem>>, %arg2: memref<2x128x128xf32, #tpu.memory_space<vmem>>, %arg3: memref<2x1x128xf32, #tpu.memory_space<vmem>>, %arg4: memref<8x128xf32, #tpu.memory_space<vmem>>) attributes {dimension_semantics = [#tpu.dimension_semantics<parallel>], iteration_bounds = array<i64: 1>, scalar_prefetch = 0 : i64, scratch_operands = 0 : i64, tpu.core_type = #tpu.core_type<tc>, window_params = [{transform_indices = @transform_0, window_bounds = array<i64: 8, 128>}, {pipeline_mode = #tpu.pipeline_mode<synchronous>, transform_indices = @transform_1, window_bounds = array<i64: 2, 128, 128>}, {pipeline_mode = #tpu.pipeline_mode<synchronous>, transform_indices = @transform_2, window_bounds = array<i64: 2, 1, 128>}, {transform_indices = @transform_3, window_bounds = array<i64: 8, 128>}]} {
    %c0 = arith.constant 0 : index
    %c0_0 = arith.constant 0 : index
    %0 = vector.load %arg1[%c0, %c0_0] : memref<8x128xf32, #tpu.memory_space<vmem>>, vector<8x128xf32>
    %c0_1 = arith.constant 0 : index
    %c0_2 = arith.constant 0 : index
    %c0_3 = arith.constant 0 : index
    %1 = vector.load %arg2[%c0_1, %c0_2, %c0_3] : memref<2x128x128xf32, #tpu.memory_space<vmem>>, vector<1x128x128xf32>
    %2 = vector.shape_cast %1 : vector<1x128x128xf32> to vector<128x128xf32>
    %cst = arith.constant dense<0.000000e+00> : vector<8x128xf32>
    %3 = tpu.matmul %0, %2, %cst {dimension_numbers = #tpu.dot_dimension_numbers<[1], [0], [0], [1], [0, 0, 1, 1], [], []>} : vector<8x128xf32>, vector<128x128xf32>, vector<8x128xf32> -> vector<8x128xf32>
    %c0_4 = arith.constant 0 : index
    %c0_5 = arith.constant 0 : index
    %c0_6 = arith.constant 0 : index
    %4 = vector.load %arg3[%c0_4, %c0_5, %c0_6] : memref<2x1x128xf32, #tpu.memory_space<vmem>>, vector<1x1x128xf32>
    %5 = vector.shape_cast %4 : vector<1x1x128xf32> to vector<1x128xf32>
    %6 = vector.broadcast %5 : vector<1x128xf32> to vector<8x128xf32>
    %7 = arith.addf %3, %6 : vector<8x128xf32>
    %cst_7 = arith.constant 0.000000e+00 : f32
    %8 = vector.broadcast %cst_7 : f32 to vector<8x128xf32>
    %9 = arith.cmpf oge, %7, %8 : vector<8x128xf32>
    %cst_8 = arith.constant 2.000000e-01 : f32
    %10 = vector.broadcast %cst_8 : f32 to vector<8x128xf32>
    %11 = arith.mulf %10, %7 : vector<8x128xf32>
    %12 = arith.select %9, %7, %11 : vector<8x128xi1>, vector<8x128xf32>
    %c1 = arith.constant 1 : index
    %c0_9 = arith.constant 0 : index
    %c0_10 = arith.constant 0 : index
    %13 = vector.load %arg2[%c1, %c0_9, %c0_10] : memref<2x128x128xf32, #tpu.memory_space<vmem>>, vector<1x128x128xf32>
    %14 = vector.shape_cast %13 : vector<1x128x128xf32> to vector<128x128xf32>
    %cst_11 = arith.constant dense<0.000000e+00> : vector<8x128xf32>
    %15 = tpu.matmul %12, %14, %cst_11 {dimension_numbers = #tpu.dot_dimension_numbers<[1], [0], [0], [1], [0, 0, 1, 1], [], []>} : vector<8x128xf32>, vector<128x128xf32>, vector<8x128xf32> -> vector<8x128xf32>
    %c1_12 = arith.constant 1 : index
    %c0_13 = arith.constant 0 : index
    %c0_14 = arith.constant 0 : index
    %16 = vector.load %arg3[%c1_12, %c0_13, %c0_14] : memref<2x1x128xf32, #tpu.memory_space<vmem>>, vector<1x1x128xf32>
    %17 = vector.shape_cast %16 : vector<1x1x128xf32> to vector<1x128xf32>
    %18 = vector.broadcast %17 : vector<1x128xf32> to vector<8x128xf32>
    %19 = arith.addf %15, %18 : vector<8x128xf32>
    %c0_15 = arith.constant 0 : index
    %c0_16 = arith.constant 0 : index
    %20 = vector.load %arg4[%c0_15, %c0_16] : memref<8x128xf32, #tpu.memory_space<vmem>>, vector<8x128xf32>
    tpu.vector_store %arg4[%c0_15, %c0_16], %19 {strides = array<i32>} : memref<8x128xf32, #tpu.memory_space<vmem>>, vector<8x128xf32>,
    return
  }
  func.func @transform_0(%arg0: i32) -> (i32, i32) {
    %c0_i32 = arith.constant 0 : i32
    %c0_i32_0 = arith.constant 0 : i32
    return %arg0, %c0_i32 : i32, i32
  }
  func.func @transform_1(%arg0: i32) -> (i32, i32, i32) {
    %c0_i32 = arith.constant 0 : i32
    %c0_i32_0 = arith.constant 0 : i32
    %c0_i32_1 = arith.constant 0 : i32
    %c0_i32_2 = arith.constant 0 : i32
    return %c0_i32, %c0_i32_0, %c0_i32_1 : i32, i32, i32
  }
  func.func @transform_2(%arg0: i32) -> (i32, i32, i32) {
    %c0_i32 = arith.constant 0 : i32
    %c0_i32_0 = arith.constant 0 : i32
    %c0_i32_1 = arith.constant 0 : i32
    %c0_i32_2 = arith.constant 0 : i32
    return %c0_i32, %c0_i32_0, %c0_i32_1 : i32, i32, i32
  }
  func.func @transform_3(%arg0: i32) -> (i32, i32) {
    %c0_i32 = arith.constant 0 : i32
    %c0_i32_0 = arith.constant 0 : i32
    return %arg0, %c0_i32 : i32, i32
  }
}

</mosaic_0001>

<llo_original>
// kernel: tpu_custom_call.1
$region0: #{tpu_custom_call.1}
  #allocation0 [shape = 'u32[]', space=smem, size = 0x4, offset = 0x4, fixed_abs, tag = 'smem constant byte address 0x4 - core index']
  #allocation1 [shape = 'u32[144,128]{1,0:T(1,128)}', space=vmem, size = 0x12000, scoped, tag = 'internal scratch']
  %s0 = inlined_call_operand.hbm [shape: f32[8,128], index: 0, kind: input, shape index: {}]
  %s1 = inlined_call_operand.hbm [shape: f32[2,128,128], index: 1, kind: input, shape index: {}]
  %s2 = inlined_call_operand.vmem [shape: f32[2,1,128], index: 2, kind: input, shape index: {}]
  %s3 = inlined_call_operand.hbm [shape: f32[8,128], index: 3, kind: output, shape index: {}]
  %s4 = sld [smem:[#allocation0]]
  $region30: #{tpu_custom_call.1} parent=0
    _
  %s6 = ssub.s32 1, %s4
  %s7 = scalar_select 0, %s6, %s4
  $region1: #{tpu_custom_call.1} parent=0
    #allocation2 [shape = 'u8[4096]{0}', space=vmem, size = 0x1000, scoped, tag = 'input window, operand 0, single buffered']
    #allocation3 [shape = 's32[1]{0}', space=sflag, size = 0x4, scoped, tag = 'scoped memory for tpu_custom_call.1']
    #allocation4 [shape = 's32[1]{0}', space=sflag, size = 0x4, scoped, tag = 'scoped memory for tpu_custom_call.1']
    #allocation5 [shape = 'u8[131072]{0}', space=vmem, size = 0x20000, scoped, tag = 'input window, operand 1, single buffered']
    #allocation6 [shape = 's32[1]{0}', space=sflag, size = 0x4, scoped, tag = 'scoped memory for tpu_custom_call.1']
    #allocation7 [shape = 'u8[4096]{0}', space=vmem, size = 0x1000, scoped, tag = 'output window, operand 0, single buffered']
    %8 = vsyncpa [#allocation3], 0
    %9 = vsyncpa [#allocation6], 0
    %10 = vsyncpa [#allocation4], 0
    // Predicated region
    $region2: #{tpu_custom_call.1} parent=1 // pred_check
      _
    $region3: #{tpu_custom_call.1} parent=1 // pred_check_branch
      %12 = sbr.rel (0) target = $region5
    $region4: #{tpu_custom_call.1} parent=1 // pred_region
      %s14 = ssub.s32 128, 128
      %15 = vsyncadd [#allocation3], %s14
      %s17 = sshll.u32 [#allocation2], 4
      %s18 = int_to_ptr.vmem [resolvable:$true] %s17
      %20 = dma.hbm_to_vmem [thread:$0]  %s0, 128, %s18, [#allocation3]
    $region5: #{tpu_custom_call.1} parent=1 // pred_fallthru
      _
    // Predicated region
    $region6: #{tpu_custom_call.1} parent=1 // pred_check
      _
    $region7: #{tpu_custom_call.1} parent=1 // pred_check_branch
      %22 = sbr.rel (0) target = $region9
    $region8: #{tpu_custom_call.1} parent=1 // pred_region
      %s24 = ssub.s32 4096, 4096
      %25 = vsyncadd [#allocation6], %s24
      %s26 = sshll.u32 [#allocation5], 4
      %s27 = int_to_ptr.vmem [resolvable:$true] %s26
      %32 = dma.hbm_to_vmem [thread:$0]  %s1, 4096, %s27, [#allocation6], 128, 128, 8
    $region9: #{tpu_custom_call.1} parent=1 // pred_fallthru
      _
    // Predicated region
    $region10: #{tpu_custom_call.1} parent=1 // pred_check
      _
    $region11: #{tpu_custom_call.1} parent=1 // pred_check_branch
      %34 = sbr.rel (0) target = $region13
    $region12: #{tpu_custom_call.1} parent=1 // pred_region
      _
    $region13: #{tpu_custom_call.1} parent=1 // pred_fallthru
      _
    // Predicated region
    $region14: #{tpu_custom_call.1} parent=1 // pred_check
      _
    $region15: #{tpu_custom_call.1} parent=1 // pred_check_branch
      %36 = sbr.rel (0) target = $region17
    $region16: #{tpu_custom_call.1} parent=1 // pred_region
      %37 = dma.done [#allocation3], 128
    $region17: #{tpu_custom_call.1} parent=1 // pred_fallthru
      _
    // Predicated region
    $region18: #{tpu_custom_call.1} parent=1 // pred_check
      _
    $region19: #{tpu_custom_call.1} parent=1 // pred_check_branch
      %39 = sbr.rel (0) target = $region21
    $region20: #{tpu_custom_call.1} parent=1 // pred_region
      %40 = dma.done [#allocation6], 4096
    $region21: #{tpu_custom_call.1} parent=1 // pred_fallthru
      _
    %v41 = vld [vmem:[#allocation2] sm:$0xff]
    %v42 = vld [vmem:[#allocation5] sm:$0xff]
    %v43 = vld [vmem:[#allocation5 + $0x8] sm:$0xff]
    %v44 = vld [vmem:[#allocation5 + $0x10] sm:$0xff]
    %v45 = vld [vmem:[#allocation5 + $0x18] sm:$0xff]
    %v46 = vld [vmem:[#allocation5 + $0x20] sm:$0xff]
    %v47 = vld [vmem:[#allocation5 + $0x28] sm:$0xff]
    %v48 = vld [vmem:[#allocation5 + $0x30] sm:$0xff]
    %v49 = vld [vmem:[#allocation5 + $0x38] sm:$0xff]
    %v50 = vld [vmem:[#allocation5 + $0x40] sm:$0xff]
    %v51 = vld [vmem:[#allocation5 + $0x48] sm:$0xff]
    %v52 = vld [vmem:[#allocation5 + $0x50] sm:$0xff]
    %v53 = vld [vmem:[#allocation5 + $0x58] sm:$0xff]
    %v54 = vld [vmem:[#allocation5 + $0x60] sm:$0xff]
    %v55 = vld [vmem:[#allocation5 + $0x68] sm:$0xff]
    %v56 = vld [vmem:[#allocation5 + $0x70] sm:$0xff]
    %v57 = vld [vmem:[#allocation5 + $0x78] sm:$0xff]
    %v58 = vld [vmem:[%s2] sm:$0x1]
    %v60 = vlaneseq
    %v61 = vshrl.u32 %v60, 7
    %v62 = vsub.s32 0, %v61
    %v63 = vrot.slane %v58, %v62
    %65 = vmatprep.subr.mxu0 0.0
    %66 = vmatpush1.msra.mxu0 %v42
    %67 = vmatprep.subr.mxu0 0.0
    %68 = vmatpush1.msra.mxu0 %v43
    %69 = vmatprep.subr.mxu0 0.0
    %70 = vmatpush1.msra.mxu0 %v44
    %71 = vmatprep.subr.mxu0 0.0
    %72 = vmatpush1.msra.mxu0 %v45
    %73 = vmatprep.subr.mxu0 0.0
    %74 = vmatpush1.msra.mxu0 %v46
    %75 = vmatprep.subr.mxu0 0.0
    %76 = vmatpush1.msra.mxu0 %v47
    %77 = vmatprep.subr.mxu0 0.0
    %78 = vmatpush1.msra.mxu0 %v48
    %79 = vmatprep.subr.mxu0 0.0
    %80 = vmatpush1.msra.mxu0 %v49
    %81 = vmatprep.subr.mxu0 0.0
    %82 = vmatpush1.msra.mxu0 %v50
    %83 = vmatprep.subr.mxu0 0.0
    %84 = vmatpush1.msra.mxu0 %v51
    %85 = vmatprep.subr.mxu0 0.0
    %86 = vmatpush1.msra.mxu0 %v52
    %87 = vmatprep.subr.mxu0 0.0
    %88 = vmatpush1.msra.mxu0 %v53
    %89 = vmatprep.subr.mxu0 0.0
    %90 = vmatpush1.msra.mxu0 %v54
    %91 = vmatprep.subr.mxu0 0.0
    %92 = vmatpush1.msra.mxu0 %v55
    %93 = vmatprep.subr.mxu0 0.0
    %94 = vmatpush1.msra.mxu0 %v56
    %95 = vmatprep.subr.mxu0 0.0
    %96 = vmatpush1.msra.mxu0 %v57
    %97 = vmatprep.subr.mxu0 0.0
    %98 = vmatpush1.msra.mxu0 0.0
    %99 = vmatprep.subr.mxu0 0.0
    %100 = vmatpush1.msra.mxu0 0.0
    %101 = vmatprep.subr.mxu0 0.0
    %102 = vmatpush1.msra.mxu0 0.0
    %103 = vmatprep.subr.mxu0 0.0
    %104 = vmatpush1.msra.mxu0 0.0
    %105 = vmatprep.subr.mxu0 0.0
    %106 = vmatpush1.msra.mxu0 0.0
    %107 = vmatprep.subr.mxu0 0.0
    %108 = vmatpush1.msra.mxu0 0.0
    %109 = vmatprep.subr.mxu0 0.0
    %110 = vmatpush1.msra.mxu0 0.0
    %111 = vmatprep.subr.mxu0 0.0
    %112 = vmatpush1.msra.mxu0 0.0
    %113 = vmatprep.subr.mxu0 0.0
    %114 = vmatpush1.msra.mxu0 0.0
    %115 = vmatprep.subr.mxu0 0.0
    %116 = vmatpush1.msra.mxu0 0.0
    %117 = vmatprep.subr.mxu0 0.0
    %118 = vmatpush1.msra.mxu0 0.0
    %119 = vmatprep.subr.mxu0 0.0
    %120 = vmatpush1.msra.mxu0 0.0
    %121 = vmatprep.subr.mxu0 0.0
    %122 = vmatpush1.msra.mxu0 0.0
    %123 = vmatprep.subr.mxu0 0.0
    %124 = vmatpush1.msra.mxu0 0.0
    %125 = vmatprep.subr.mxu0 0.0
    %126 = vmatpush1.msra.mxu0 0.0
    %127 = vmatprep.subr.mxu0 0.0
    %128 = vmatpush1.msra.mxu0 0.0
    %129 = vmatprep.mubr.f32.mxu0 0.0
    %130 = vmatmul.mubr.f32.gmra.mrb[0].mxu0 %v41
    %v131 = vpop.f32.mrb[0].mxu0
    %v132 = vadd.f32 %v63, %v131
    %v133 = vpop.f32.mrb[0].mxu0
    %134 = vdwg.mxu0
    %vm135 = vcmp.ge.f32.partialorder %v132, 0.0
    %v136 = vmul.f32 %v132, 0.2
    %v137 = vsel %vm135, %v132, %v136
    %s138 = scalar_lea.vmem [#allocation5], 128
    %v139 = vld [vmem:[%s138] sm:$0xff]
    %v140 = vld [vmem:[%s138 + $0x8] sm:$0xff]
    %v141 = vld [vmem:[%s138 + $0x10] sm:$0xff]
    %v142 = vld [vmem:[%s138 + $0x18] sm:$0xff]
    %v143 = vld [vmem:[%s138 + $0x20] sm:$0xff]
    %v144 = vld [vmem:[%s138 + $0x28] sm:$0xff]
    %v145 = vld [vmem:[%s138 + $0x30] sm:$0xff]
    %v146 = vld [vmem:[%s138 + $0x38] sm:$0xff]
    %v147 = vld [vmem:[%s138 + $0x40] sm:$0xff]
    %v148 = vld [vmem:[%s138 + $0x48] sm:$0xff]
    %v149 = vld [vmem:[%s138 + $0x50] sm:$0xff]
    %v150 = vld [vmem:[%s138 + $0x58] sm:$0xff]
    %v151 = vld [vmem:[%s138 + $0x60] sm:$0xff]
    %v152 = vld [vmem:[%s138 + $0x68] sm:$0xff]
    %v153 = vld [vmem:[%s138 + $0x70] sm:$0xff]
    %v154 = vld [vmem:[%s138 + $0x78] sm:$0xff]
    %s155 = scalar_lea.vmem %s2, 1
    %v156 = vld [vmem:[%s155] sm:$0x1]
    %v158 = vlaneseq
    %v159 = vshrl.u32 %v158, 7
    %v160 = vsub.s32 0, %v159
    %v161 = vrot.slane %v156, %v160
    %163 = vmatprep.subr.mxu0 0.0
    %164 = vmatpush1.msra.mxu0 %v139
    %165 = vmatprep.subr.mxu0 0.0
    %166 = vmatpush1.msra.mxu0 %v140
    %167 = vmatprep.subr.mxu0 0.0
    %168 = vmatpush1.msra.mxu0 %v141
    %169 = vmatprep.subr.mxu0 0.0
    %170 = vmatpush1.msra.mxu0 %v142
    %171 = vmatprep.subr.mxu0 0.0
    %172 = vmatpush1.msra.mxu0 %v143
    %173 = vmatprep.subr.mxu0 0.0
    %174 = vmatpush1.msra.mxu0 %v144
    %175 = vmatprep.subr.mxu0 0.0
    %176 = vmatpush1.msra.mxu0 %v145
    %177 = vmatprep.subr.mxu0 0.0
    %178 = vmatpush1.msra.mxu0 %v146
    %179 = vmatprep.subr.mxu0 0.0
    %180 = vmatpush1.msra.mxu0 %v147
    %181 = vmatprep.subr.mxu0 0.0
    %182 = vmatpush1.msra.mxu0 %v148
    %183 = vmatprep.subr.mxu0 0.0
    %184 = vmatpush1.msra.mxu0 %v149
    %185 = vmatprep.subr.mxu0 0.0
    %186 = vmatpush1.msra.mxu0 %v150
    %187 = vmatprep.subr.mxu0 0.0
    %188 = vmatpush1.msra.mxu0 %v151
    %189 = vmatprep.subr.mxu0 0.0
    %190 = vmatpush1.msra.mxu0 %v152
    %191 = vmatprep.subr.mxu0 0.0
    %192 = vmatpush1.msra.mxu0 %v153
    %193 = vmatprep.subr.mxu0 0.0
    %194 = vmatpush1.msra.mxu0 %v154
    %195 = vmatprep.subr.mxu0 0.0
    %196 = vmatpush1.msra.mxu0 0.0
    %197 = vmatprep.subr.mxu0 0.0
    %198 = vmatpush1.msra.mxu0 0.0
    %199 = vmatprep.subr.mxu0 0.0
    %200 = vmatpush1.msra.mxu0 0.0
    %201 = vmatprep.subr.mxu0 0.0
    %202 = vmatpush1.msra.mxu0 0.0
    %203 = vmatprep.subr.mxu0 0.0
    %204 = vmatpush1.msra.mxu0 0.0
    %205 = vmatprep.subr.mxu0 0.0
    %206 = vmatpush1.msra.mxu0 0.0
    %207 = vmatprep.subr.mxu0 0.0
    %208 = vmatpush1.msra.mxu0 0.0
    %209 = vmatprep.subr.mxu0 0.0
    %210 = vmatpush1.msra.mxu0 0.0
    %211 = vmatprep.subr.mxu0 0.0
    %212 = vmatpush1.msra.mxu0 0.0
    %213 = vmatprep.subr.mxu0 0.0
    %214 = vmatpush1.msra.mxu0 0.0
    %215 = vmatprep.subr.mxu0 0.0
    %216 = vmatpush1.msra.mxu0 0.0
    %217 = vmatprep.subr.mxu0 0.0
    %218 = vmatpush1.msra.mxu0 0.0
    %219 = vmatprep.subr.mxu0 0.0
    %220 = vmatpush1.msra.mxu0 0.0
    %221 = vmatprep.subr.mxu0 0.0
    %222 = vmatpush1.msra.mxu0 0.0
    %223 = vmatprep.subr.mxu0 0.0
    %224 = vmatpush1.msra.mxu0 0.0
    %225 = vmatprep.subr.mxu0 0.0
    %226 = vmatpush1.msra.mxu0 0.0
    %227 = vmatprep.mubr.f32.mxu0 0.0
    %228 = vmatmul.mubr.f32.gmra.mrb[0].mxu0 %v137
    %v229 = vpop.f32.mrb[0].mxu0
    %v230 = vadd.f32 %v161, %v229
    %v231 = vpop.f32.mrb[0].mxu0
    %232 = vdwg.mxu0
    %233 = vst [vmem:[#allocation7] sm:$0xff] %v230
    // Predicated region
    $region22: #{tpu_custom_call.1} parent=1 // pred_check
      _
    $region23: #{tpu_custom_call.1} parent=1 // pred_check_branch
      %235 = sbr.rel (0) target = $region25
    $region24: #{tpu_custom_call.1} parent=1 // pred_region
      %s237 = ssub.s32 128, 128
      %238 = vsyncadd [#allocation4], %s237
      %s240 = sshll.u32 [#allocation7], 4
      %s241 = int_to_ptr.vmem [resolvable:$true] %s240
      %243 = dma.vmem_to_hbm [thread:$0]  %s241, 128, %s3, [#allocation4]
    $region25: #{tpu_custom_call.1} parent=1 // pred_fallthru
      _
    // Predicated region
    $region26: #{tpu_custom_call.1} parent=1 // pred_check
      _
    $region27: #{tpu_custom_call.1} parent=1 // pred_check_branch
      %245 = sbr.rel (0) target = $region29
    $region28: #{tpu_custom_call.1} parent=1 // pred_region
      %246 = dma.done [#allocation4], 128
    $region29: #{tpu_custom_call.1} parent=1 // pred_fallthru
      _
    %247 = vsyncpa [#allocation3], 1
    %248 = vsyncpa [#allocation6], 1
    %249 = vsyncpa [#allocation4], 1

</llo_original>
